<compile_context>
chip_gen: v7x
topology: tpu7x:2x2x1
jax: 0.10.0
libtpu: 0.0.40
codegen_flags: <defaults>
</compile_context>

<pallas_src>
import functools

import jax
import jax.numpy as jnp
from jax.experimental import pallas as pl
from jax.experimental.pallas import tpu as pltpu


# ------------------------- configuration (synthetic) -------------------------
CONFIGS = {
    "state_space": 16,
    "actor_layers": [32, 32],   # torch module indexes [0]/[1]; must be equal for it to run
    "critic_layers": [32, 32],
    "action_space": 8,
}
BATCH = 8

LANES = 128       # lane width of the fused hidden / output slabs
BIAS_ROWS = 8     # one sublane group holding the 3 packed bias rows


def _round_up(x, m):
    return (x + m - 1) // m * m


# --------------------------------- kernel ------------------------------------
def _fused_actor_critic_kernel(state_ref, action_ref, wslab_ref, out_ref, *, A):
    x = state_ref[...]                  # [TB, R1] f32 (feature-padded state)
    R1 = x.shape[1]

    # static, 8-aligned slices of the single resident weight slab
    w1 = wslab_ref[0:R1, :]                                       # [R1, 128]
    w2 = wslab_ref[R1:R1 + LANES, :]                              # [128, 128] block-diag
    w3 = wslab_ref[R1 + LANES:R1 + 2 * LANES, :]                  # [128, 128] block-diag
    bias = wslab_ref[R1 + 2 * LANES:R1 + 2 * LANES + BIAS_ROWS, :]  # [8, 128]
    b1, b2, b3 = bias[0:1, :], bias[1:2, :], bias[2:3, :]

    # fused actor||critic MLP (actor lanes 0..H_A-1, critic lanes H_A.., rest zero)
    h = jnp.tanh(jnp.dot(x, w1, preferred_element_type=jnp.float32) + b1)
    h = jnp.tanh(jnp.dot(h, w2, preferred_element_type=jnp.float32) + b2)
    y3 = jnp.dot(h, w3, preferred_element_type=jnp.float32) + b3   # [TB, 128]

    TB = y3.shape[0]
    lane = jax.lax.broadcasted_iota(jnp.int32, (TB, LANES), 1)
    valid = lane < A                    # actor logit lanes

    # masked log-softmax over lanes 0..A-1
    logits = jnp.where(valid, y3, jnp.float32(-1e30))
    m = jnp.max(logits, axis=-1, keepdims=True)
    shifted = logits - m
    denom = jnp.sum(jnp.exp(shifted), axis=-1, keepdims=True)
    logp = shifted - jnp.log(denom)     # log-softmax; masked lanes ~ -1e30
    probs = jnp.exp(logp)               # softmax; masked lanes underflow to exactly 0

    # Categorical.log_prob(action): one-hot select (no dynamic gather on TPU)
    act = action_ref[...]               # [TB, 1] int32
    logp_sel = jnp.sum(jnp.where(lane == act, logp, 0.0), axis=-1, keepdims=True)
    # Categorical.entropy()
    ent = -jnp.sum(probs * jnp.where(valid, logp, 0.0), axis=-1, keepdims=True)

    # single lane-dense output slab: [probs(0..A-1) | logp(A) | value(A+1) | entropy(A+2)]
    out = probs                                        # lanes >= A are exactly 0
    out = out + jnp.where(lane == A, logp_sel, 0.0)
    out = out + jnp.where(lane == A + 1, y3, 0.0)      # critic value lives at lane A+1
    out = out + jnp.where(lane == A + 2, ent, 0.0)
    out_ref[...] = out


# -------------------- one-time packing of weights + biases --------------------
def pack_params(params, configs):
    """Pack all 6 Linear layers (weights [in,out] + biases) into one f32 slab.

    Row layout (all 8-aligned):
      rows [0, R1)                 : layer-1 weights, actor cols 0..H_A-1, critic cols H_A..
      rows [R1, R1+128)            : layer-2 block-diagonal weights
      rows [R1+128, R1+256)        : layer-3 block-diagonal weights
                                     (actor -> logit lanes 0..A-1, critic -> value lane A+1)
      rows [R1+256, R1+256+8)      : bias rows (b1, b2, b3, zero padding)
    """
    S = configs["state_space"]
    H_A = configs["actor_layers"][0]
    H_C1 = configs["critic_layers"][0]
    H_C2 = configs["critic_layers"][1]
    A = configs["action_space"]
    assert configs["actor_layers"][0] == configs["actor_layers"][1]
    assert H_A + max(H_C1, H_C2) <= LANES, "fused hidden width must fit 128 lanes"
    assert A + 3 <= LANES, "probs + (logp, value, entropy) must fit 128 lanes"

    R1 = _round_up(S, 8)
    R_TOT = R1 + 2 * LANES + BIAS_ROWS
    slab = jnp.zeros((R_TOT, LANES), jnp.float32)

    # layer 1 (concat along output lanes)
    slab = slab.at[:S, :H_A].set(params["aw1"])
    slab = slab.at[:S, H_A:H_A + H_C1].set(params["cw1"])
    # layer 2 (block diagonal)
    r2 = R1
    slab = slab.at[r2:r2 + H_A, :H_A].set(params["aw2"])
    slab = slab.at[r2 + H_A:r2 + H_A + H_C1, H_A:H_A + H_C2].set(params["cw2"])
    # layer 3 (block diagonal; critic column placed at output lane A+1)
    r3 = R1 + LANES
    slab = slab.at[r3:r3 + H_A, :A].set(params["aw3"])
    slab = slab.at[r3 + H_A:r3 + H_A + H_C2, A + 1:A + 2].set(params["cw3"])
    # biases
    rb = R1 + 2 * LANES
    slab = slab.at[rb, :H_A].set(params["ab1"][0])
    slab = slab.at[rb, H_A:H_A + H_C1].set(params["cb1"][0])
    slab = slab.at[rb + 1, :H_A].set(params["ab2"][0])
    slab = slab.at[rb + 1, H_A:H_A + H_C2].set(params["cb2"][0])
    slab = slab.at[rb + 2, :A].set(params["ab3"][0])
    slab = slab.at[rb + 2, A + 1].set(params["cb3"][0, 0])
    return slab


# --------------------------------- wrapper ------------------------------------
def actor_critic_evaluate(state, action, wslab, configs):
    """Pallas equivalent of ActorCritic.evaluate(state, action).

    Returns (action_logprobs [B], state_value [B], dist_entropy [B], action_probs [B, A]).
    """
    B, S = state.shape
    A = configs["action_space"]
    R1 = _round_up(S, 8)
    assert wslab.shape == (R1 + 2 * LANES + BIAS_ROWS, LANES)

    # batch tile: big (256) for real PPO batches, exact (rounded to 8 sublanes) for tiny ones
    TB = 256 if B >= 256 else _round_up(B, 8)
    B_pad = _round_up(B, TB)

    x = state.astype(jnp.float32)
    if R1 != S:
        x = jnp.pad(x, ((0, 0), (0, R1 - S)))
    act2d = action.astype(jnp.int32).reshape(B, 1)
    if B_pad != B:
        x = jnp.pad(x, ((0, B_pad - B), (0, 0)))
        act2d = jnp.pad(act2d, ((0, B_pad - B), (0, 0)))

    kernel = functools.partial(_fused_actor_critic_kernel, A=A)
    out = pl.pallas_call(
        kernel,
        out_shape=jax.ShapeDtypeStruct((B_pad, LANES), jnp.float32),
        grid=(pl.cdiv(B_pad, TB),),
        in_specs=[
            pl.BlockSpec((TB, R1), lambda i: (i, 0)),        # state tile
            pl.BlockSpec((TB, 1), lambda i: (i, 0)),         # action tile
            pl.BlockSpec(wslab.shape, lambda i: (0, 0)),     # weight slab stays resident
        ],
        out_specs=pl.BlockSpec((TB, LANES), lambda i: (i, 0)),
        compiler_params=pltpu.CompilerParams(dimension_semantics=("parallel",)),
    )(x, act2d, wslab)

    probs = out[:B, :A]
    logp = out[:B, A]
    value = out[:B, A + 1]
    ent = out[:B, A + 2]
    return logp, value, ent, probs


# -------------------------- deterministic parameter init -----------------------
def init_params(key, configs):
    """PyTorch nn.Linear-style init: U(-1/sqrt(fan_in), 1/sqrt(fan_in)). Weights stored [in, out]."""
    S = configs["state_space"]
    H = configs["actor_layers"][0]
    A = configs["action_space"]
    C = configs["critic_layers"][0]

    def linear(key, fan_in, fan_out):
        kw, kb = jax.random.split(key)
        bound = 1.0 / jnp.sqrt(fan_in)
        w = jax.random.uniform(kw, (fan_in, fan_out), jnp.float32, -bound, bound)
        b = jax.random.uniform(kb, (1, fan_out), jnp.float32, -bound, bound)
        return w, b

    keys = jax.random.split(key, 6)
    aw1, ab1 = linear(keys[0], S, H)
    aw2, ab2 = linear(keys[1], H, H)
    aw3, ab3 = linear(keys[2], configs["actor_layers"][1], A)
    cw1, cb1 = linear(keys[3], S, C)
    cw2, cb2 = linear(keys[4], C, configs["critic_layers"][1])
    cw3, cb3 = linear(keys[5], configs["critic_layers"][1], 1)
    return dict(aw1=aw1, ab1=ab1, aw2=aw2, ab2=ab2, aw3=aw3, ab3=ab3,
                cw1=cw1, cb1=cb1, cw2=cw2, cb2=cb2, cw3=cw3, cb3=cb3)


# ------------------------------ pure-JAX reference ------------------------------
def _reference(state, action, p):
    h = jnp.tanh(state @ p["aw1"] + p["ab1"])
    h = jnp.tanh(h @ p["aw2"] + p["ab2"])
    logits = h @ p["aw3"] + p["ab3"]
    probs = jax.nn.softmax(logits, axis=-1)
    logp_all = jax.nn.log_softmax(logits, axis=-1)
    logp = jnp.take_along_axis(logp_all, action[:, None].astype(jnp.int32), axis=-1)[:, 0]
    ent = -jnp.sum(probs * logp_all, axis=-1)
    c = jnp.tanh(state @ p["cw1"] + p["cb1"])
    c = jnp.tanh(c @ p["cw2"] + p["cb2"])
    value = (c @ p["cw3"] + p["cb3"])[:, 0]
    return logp, value, ent, probs


# ----------------------------------- main ---------------------------------------
if __name__ == "__main__":
    key = jax.random.PRNGKey(0)
    k_param, k_state, k_act = jax.random.split(key, 3)

    params = init_params(k_param, CONFIGS)
    wslab = pack_params(params, CONFIGS)        # one-time packing (outside the hot path)

    state = jax.random.normal(k_state, (BATCH, CONFIGS["state_space"]), jnp.float32)
    action = jax.random.randint(k_act, (BATCH,), 0, CONFIGS["action_space"], jnp.int32)

    logp, value, ent, probs = actor_critic_evaluate(state, action, wslab, CONFIGS)
    jax.block_until_ready((logp, value, ent, probs))

    r_logp, r_value, r_ent, r_probs = _reference(state, action, params)
    assert jnp.allclose(logp, r_logp, atol=1e-5), "logprob mismatch"
    assert jnp.allclose(value, r_value, atol=1e-5), "value mismatch"
    assert jnp.allclose(ent, r_ent, atol=1e-5), "entropy mismatch"
    assert jnp.allclose(probs, r_probs, atol=1e-5), "probs mismatch"

    print("KERNEL_OK")
</pallas_src>

<mosaic_0001>
module attributes {stable_mosaic.version = 11 : i64} {
  func.func @_fused_actor_critic_kernel(%arg0: i32, %arg1: memref<8x16xf32, #tpu.memory_space<vmem>>, %arg2: memref<8x1xi32, #tpu.memory_space<vmem>>, %arg3: memref<280x128xf32, #tpu.memory_space<vmem>>, %arg4: memref<8x128xf32, #tpu.memory_space<vmem>>) attributes {dimension_semantics = [#tpu.dimension_semantics<parallel>], iteration_bounds = array<i64: 1>, scalar_prefetch = 0 : i64, scratch_operands = 0 : i64, tpu.core_type = #tpu.core_type<tc>, window_params = [{transform_indices = @transform_0, window_bounds = array<i64: 8, 16>}, {transform_indices = @transform_1, window_bounds = array<i64: 8, 1>}, {pipeline_mode = #tpu.pipeline_mode<synchronous>, transform_indices = @transform_2, window_bounds = array<i64: 280, 128>}, {transform_indices = @transform_3, window_bounds = array<i64: 8, 128>}]} {
    %c0 = arith.constant 0 : index
    %c0_0 = arith.constant 0 : index
    %0 = vector.load %arg1[%c0, %c0_0] : memref<8x16xf32, #tpu.memory_space<vmem>>, vector<8x16xf32>
    %c0_1 = arith.constant 0 : index
    %c0_2 = arith.constant 0 : index
    %1 = vector.load %arg3[%c0_1, %c0_2] : memref<280x128xf32, #tpu.memory_space<vmem>>, vector<16x128xf32>
    %c16 = arith.constant 16 : index
    %c0_3 = arith.constant 0 : index
    %2 = vector.load %arg3[%c16, %c0_3] : memref<280x128xf32, #tpu.memory_space<vmem>>, vector<128x128xf32>
    %c144 = arith.constant 144 : index
    %c0_4 = arith.constant 0 : index
    %3 = vector.load %arg3[%c144, %c0_4] : memref<280x128xf32, #tpu.memory_space<vmem>>, vector<128x128xf32>
    %c272 = arith.constant 272 : index
    %c0_5 = arith.constant 0 : index
    %4 = vector.load %arg3[%c272, %c0_5] : memref<280x128xf32, #tpu.memory_space<vmem>>, vector<8x128xf32>
    %5 = vector.extract_strided_slice %4 {offsets = [0, 0], sizes = [1, 128], strides = [1, 1]} : vector<8x128xf32> to vector<1x128xf32>
    %6 = vector.extract_strided_slice %4 {offsets = [1, 0], sizes = [1, 128], strides = [1, 1]} : vector<8x128xf32> to vector<1x128xf32>
    %7 = vector.extract_strided_slice %4 {offsets = [2, 0], sizes = [1, 128], strides = [1, 1]} : vector<8x128xf32> to vector<1x128xf32>
    %cst = arith.constant dense<0.000000e+00> : vector<8x128xf32>
    %8 = tpu.matmul %0, %1, %cst {dimension_numbers = #tpu.dot_dimension_numbers<[1], [0], [0], [1], [0, 0, 1, 1], [], []>} : vector<8x16xf32>, vector<16x128xf32>, vector<8x128xf32> -> vector<8x128xf32>
    %9 = vector.broadcast %5 : vector<1x128xf32> to vector<8x128xf32>
    %10 = arith.addf %8, %9 : vector<8x128xf32>
    %11 = math.tanh %10 : vector<8x128xf32>
    %cst_6 = arith.constant dense<0.000000e+00> : vector<8x128xf32>
    %12 = tpu.matmul %11, %2, %cst_6 {dimension_numbers = #tpu.dot_dimension_numbers<[1], [0], [0], [1], [0, 0, 1, 1], [], []>} : vector<8x128xf32>, vector<128x128xf32>, vector<8x128xf32> -> vector<8x128xf32>
    %13 = vector.broadcast %6 : vector<1x128xf32> to vector<8x128xf32>
    %14 = arith.addf %12, %13 : vector<8x128xf32>
    %15 = math.tanh %14 : vector<8x128xf32>
    %cst_7 = arith.constant dense<0.000000e+00> : vector<8x128xf32>
    %16 = tpu.matmul %15, %3, %cst_7 {dimension_numbers = #tpu.dot_dimension_numbers<[1], [0], [0], [1], [0, 0, 1, 1], [], []>} : vector<8x128xf32>, vector<128x128xf32>, vector<8x128xf32> -> vector<8x128xf32>
    %17 = vector.broadcast %7 : vector<1x128xf32> to vector<8x128xf32>
    %18 = arith.addf %16, %17 : vector<8x128xf32>
    %19 = tpu.iota {dimensions = array<i32: 1>} : vector<8x128xi32>
    %c8_i32 = arith.constant 8 : i32
    %20 = vector.broadcast %c8_i32 : i32 to vector<8x128xi32>
    %21 = arith.cmpi slt, %19, %20 : vector<8x128xi32>
    %cst_8 = arith.constant -1.000000e+30 : f32
    %22 = vector.broadcast %cst_8 : f32 to vector<8x128xf32>
    %23 = arith.select %21, %18, %22 : vector<8x128xi1>, vector<8x128xf32>
    %cst_9 = arith.constant dense<0xFF800000> : vector<8xf32>
    %24 = vector.multi_reduction <maximumf>, %23, %cst_9 [1] : vector<8x128xf32> to vector<8xf32>
    %25 = vector.shape_cast %24 : vector<8xf32> to vector<8x1xf32>
    %26 = vector.broadcast %25 : vector<8x1xf32> to vector<8x128xf32>
    %27 = arith.subf %23, %26 : vector<8x128xf32>
    %28 = math.exp %27 : vector<8x128xf32>
    %cst_10 = arith.constant dense<0.000000e+00> : vector<8xf32>
    %29 = vector.multi_reduction <add>, %28, %cst_10 [1] : vector<8x128xf32> to vector<8xf32>
    %30 = vector.shape_cast %29 : vector<8xf32> to vector<8x1xf32>
    %31 = math.log %30 : vector<8x1xf32>
    %32 = vector.broadcast %31 : vector<8x1xf32> to vector<8x128xf32>
    %33 = arith.subf %27, %32 : vector<8x128xf32>
    %34 = math.exp %33 : vector<8x128xf32>
    %c0_11 = arith.constant 0 : index
    %c0_12 = arith.constant 0 : index
    %35 = vector.load %arg2[%c0_11, %c0_12] : memref<8x1xi32, #tpu.memory_space<vmem>>, vector<8x1xi32>
    %36 = vector.broadcast %35 : vector<8x1xi32> to vector<8x128xi32>
    %37 = arith.cmpi eq, %19, %36 : vector<8x128xi32>
    %cst_13 = arith.constant 0.000000e+00 : f32
    %38 = vector.broadcast %cst_13 : f32 to vector<8x128xf32>
    %39 = arith.select %37, %33, %38 : vector<8x128xi1>, vector<8x128xf32>
    %cst_14 = arith.constant dense<0.000000e+00> : vector<8xf32>
    %40 = vector.multi_reduction <add>, %39, %cst_14 [1] : vector<8x128xf32> to vector<8xf32>
    %41 = vector.shape_cast %40 : vector<8xf32> to vector<8x1xf32>
    %cst_15 = arith.constant 0.000000e+00 : f32
    %42 = vector.broadcast %cst_15 : f32 to vector<8x128xf32>
    %43 = arith.select %21, %33, %42 : vector<8x128xi1>, vector<8x128xf32>
    %44 = arith.mulf %34, %43 : vector<8x128xf32>
    %cst_16 = arith.constant dense<0.000000e+00> : vector<8xf32>
    %45 = vector.multi_reduction <add>, %44, %cst_16 [1] : vector<8x128xf32> to vector<8xf32>
    %46 = vector.shape_cast %45 : vector<8xf32> to vector<8x1xf32>
    %cst_17 = arith.constant 0.000000e+00 : f32
    %47 = vector.broadcast %cst_17 : f32 to vector<8x1xf32>
    %48 = arith.subf %47, %46 : vector<8x1xf32>
    %c8_i32_18 = arith.constant 8 : i32
    %49 = vector.broadcast %c8_i32_18 : i32 to vector<8x128xi32>
    %50 = arith.cmpi eq, %19, %49 : vector<8x128xi32>
    %cst_19 = arith.constant 0.000000e+00 : f32
    %51 = vector.shape_cast %41 : vector<8x1xf32> to vector<8x1xf32>
    %52 = vector.broadcast %51 : vector<8x1xf32> to vector<8x128xf32>
    %53 = vector.broadcast %cst_19 : f32 to vector<8x128xf32>
    %54 = arith.select %50, %52, %53 : vector<8x128xi1>, vector<8x128xf32>
    %55 = arith.addf %34, %54 : vector<8x128xf32>
    %c9_i32 = arith.constant 9 : i32
    %56 = vector.broadcast %c9_i32 : i32 to vector<8x128xi32>
    %57 = arith.cmpi eq, %19, %56 : vector<8x128xi32>
    %cst_20 = arith.constant 0.000000e+00 : f32
    %58 = vector.broadcast %cst_20 : f32 to vector<8x128xf32>
    %59 = arith.select %57, %18, %58 : vector<8x128xi1>, vector<8x128xf32>
    %60 = arith.addf %55, %59 : vector<8x128xf32>
    %c10_i32 = arith.constant 10 : i32
    %61 = vector.broadcast %c10_i32 : i32 to vector<8x128xi32>
    %62 = arith.cmpi eq, %19, %61 : vector<8x128xi32>
    %cst_21 = arith.constant 0.000000e+00 : f32
    %63 = vector.shape_cast %48 : vector<8x1xf32> to vector<8x1xf32>
    %64 = vector.broadcast %63 : vector<8x1xf32> to vector<8x128xf32>
    %65 = vector.broadcast %cst_21 : f32 to vector<8x128xf32>
    %66 = arith.select %62, %64, %65 : vector<8x128xi1>, vector<8x128xf32>
    %67 = arith.addf %60, %66 : vector<8x128xf32>
    %c0_22 = arith.constant 0 : index
    %c0_23 = arith.constant 0 : index
    %68 = vector.load %arg4[%c0_22, %c0_23] : memref<8x128xf32, #tpu.memory_space<vmem>>, vector<8x128xf32>
    tpu.vector_store %arg4[%c0_22, %c0_23], %67 {strides = array<i32>} : memref<8x128xf32, #tpu.memory_space<vmem>>, vector<8x128xf32>,
    return
  }
  func.func @transform_0(%arg0: i32) -> (i32, i32) {
    %c0_i32 = arith.constant 0 : i32
    %c0_i32_0 = arith.constant 0 : i32
    return %arg0, %c0_i32 : i32, i32
  }
  func.func @transform_1(%arg0: i32) -> (i32, i32) {
    %c0_i32 = arith.constant 0 : i32
    %c0_i32_0 = arith.constant 0 : i32
    return %arg0, %c0_i32 : i32, i32
  }
  func.func @transform_2(%arg0: i32) -> (i32, i32) {
    %c0_i32 = arith.constant 0 : i32
    %c0_i32_0 = arith.constant 0 : i32
    %c0_i32_1 = arith.constant 0 : i32
    return %c0_i32, %c0_i32_0 : i32, i32
  }
  func.func @transform_3(%arg0: i32) -> (i32, i32) {
    %c0_i32 = arith.constant 0 : i32
    %c0_i32_0 = arith.constant 0 : i32
    return %arg0, %c0_i32 : i32, i32
  }
}

</mosaic_0001>

<llo_original>
// kernel: tpu_custom_call.1
$region0: #{tpu_custom_call.1}
  #allocation0 [shape = 'u32[]', space=smem, size = 0x4, offset = 0x4, fixed_abs, tag = 'smem constant byte address 0x4 - core index']
  #allocation1 [shape = 'u32[144,128]{1,0:T(1,128)}', space=vmem, size = 0x12000, scoped, tag = 'internal scratch']
  %s0 = inlined_call_operand.vmem [shape: f32[8,16], index: 0, kind: input, shape index: {}]
  %s1 = inlined_call_operand.vmem [shape: s32[8,1], index: 1, kind: input, shape index: {}]
  %s2 = inlined_call_operand.hbm [shape: f32[280,128], index: 2, kind: input, shape index: {}]
  %s3 = inlined_call_operand.hbm [shape: f32[8,128], index: 3, kind: output, shape index: {}]
  %s4 = sld [smem:[#allocation0]]
  $region26: #{tpu_custom_call.1} parent=0
    _
  %s6 = ssub.s32 1, %s4
  %s7 = scalar_select 0, %s6, %s4
  $region1: #{tpu_custom_call.1} parent=0
    #allocation2 [shape = 'u8[143360]{0}', space=vmem, size = 0x23000, scoped, tag = 'input window, operand 2, single buffered']
    #allocation3 [shape = 's32[1]{0}', space=sflag, size = 0x4, scoped, tag = 'scoped memory for tpu_custom_call.1']
    #allocation4 [shape = 's32[1]{0}', space=sflag, size = 0x4, scoped, tag = 'scoped memory for tpu_custom_call.1']
    #allocation5 [shape = 'u8[4096]{0}', space=vmem, size = 0x1000, scoped, tag = 'output window, operand 0, single buffered']
    %8 = vsyncpa [#allocation3], 0
    %9 = vsyncpa [#allocation4], 0
    // Predicated region
    $region2: #{tpu_custom_call.1} parent=1 // pred_check
      _
    $region3: #{tpu_custom_call.1} parent=1 // pred_check_branch
      %11 = sbr.rel (0) target = $region5
    $region4: #{tpu_custom_call.1} parent=1 // pred_region
      _
    $region5: #{tpu_custom_call.1} parent=1 // pred_fallthru
      _
    // Predicated region
    $region6: #{tpu_custom_call.1} parent=1 // pred_check
      _
    $region7: #{tpu_custom_call.1} parent=1 // pred_check_branch
      %13 = sbr.rel (0) target = $region9
    $region8: #{tpu_custom_call.1} parent=1 // pred_region
      _
    $region9: #{tpu_custom_call.1} parent=1 // pred_fallthru
      _
    // Predicated region
    $region10: #{tpu_custom_call.1} parent=1 // pred_check
      _
    $region11: #{tpu_custom_call.1} parent=1 // pred_check_branch
      %15 = sbr.rel (0) target = $region13
    $region12: #{tpu_custom_call.1} parent=1 // pred_region
      %s17 = ssub.s32 4480, 4480
      %18 = vsyncadd [#allocation3], %s17
      %s19 = sshll.u32 [#allocation2], 4
      %s20 = int_to_ptr.vmem [resolvable:$true] %s19
      %25 = dma.hbm_to_vmem [thread:$0]  %s2, 4480, %s20, [#allocation3], 128, 128, 8
    $region13: #{tpu_custom_call.1} parent=1 // pred_fallthru
      _
    // Predicated region
    $region14: #{tpu_custom_call.1} parent=1 // pred_check
      _
    $region15: #{tpu_custom_call.1} parent=1 // pred_check_branch
      %27 = sbr.rel (0) target = $region17
    $region16: #{tpu_custom_call.1} parent=1 // pred_region
      %28 = dma.done [#allocation3], 4480
    $region17: #{tpu_custom_call.1} parent=1 // pred_fallthru
      _
    %v29 = vld [vmem:[%s0] sm:$0xff]
    %v30 = vld [vmem:[#allocation2] sm:$0xff]
    %v31 = vld [vmem:[#allocation2 + $0x8] sm:$0xff]
    %v32 = vld [vmem:[#allocation2 + $0x10] sm:$0xff]
    %v33 = vld [vmem:[#allocation2 + $0x18] sm:$0xff]
    %v34 = vld [vmem:[#allocation2 + $0x20] sm:$0xff]
    %v35 = vld [vmem:[#allocation2 + $0x28] sm:$0xff]
    %v36 = vld [vmem:[#allocation2 + $0x30] sm:$0xff]
    %v37 = vld [vmem:[#allocation2 + $0x38] sm:$0xff]
    %v38 = vld [vmem:[#allocation2 + $0x40] sm:$0xff]
    %v39 = vld [vmem:[#allocation2 + $0x48] sm:$0xff]
    %v40 = vld [vmem:[#allocation2 + $0x50] sm:$0xff]
    %v41 = vld [vmem:[#allocation2 + $0x58] sm:$0xff]
    %v42 = vld [vmem:[#allocation2 + $0x60] sm:$0xff]
    %v43 = vld [vmem:[#allocation2 + $0x68] sm:$0xff]
    %v44 = vld [vmem:[#allocation2 + $0x70] sm:$0xff]
    %v45 = vld [vmem:[#allocation2 + $0x78] sm:$0xff]
    %v46 = vld [vmem:[#allocation2 + $0x80] sm:$0xff]
    %v47 = vld [vmem:[#allocation2 + $0x88] sm:$0xff]
    %v48 = vld [vmem:[#allocation2 + $0x90] sm:$0xff]
    %v49 = vld [vmem:[#allocation2 + $0x98] sm:$0xff]
    %v50 = vld [vmem:[#allocation2 + $0xa0] sm:$0xff]
    %v51 = vld [vmem:[#allocation2 + $0xa8] sm:$0xff]
    %v52 = vld [vmem:[#allocation2 + $0xb0] sm:$0xff]
    %v53 = vld [vmem:[#allocation2 + $0xb8] sm:$0xff]
    %v54 = vld [vmem:[#allocation2 + $0xc0] sm:$0xff]
    %v55 = vld [vmem:[#allocation2 + $0xc8] sm:$0xff]
    %v56 = vld [vmem:[#allocation2 + $0xd0] sm:$0xff]
    %v57 = vld [vmem:[#allocation2 + $0xd8] sm:$0xff]
    %v58 = vld [vmem:[#allocation2 + $0xe0] sm:$0xff]
    %v59 = vld [vmem:[#allocation2 + $0xe8] sm:$0xff]
    %v60 = vld [vmem:[#allocation2 + $0xf0] sm:$0xff]
    %v61 = vld [vmem:[#allocation2 + $0xf8] sm:$0xff]
    %v62 = vld [vmem:[#allocation2 + $0x100] sm:$0xff]
    %v63 = vld [vmem:[#allocation2 + $0x108] sm:$0xff]
    %v64 = vld [vmem:[#allocation2 + $0x110] sm:$0xff]
    %v65 = vlaneseq
    %v66 = vshrl.u32 %v65, 7
    %v67 = vsub.s32 0, %v66
    %v68 = vrot.slane %v64, %v67
    %vm69 = vcmask 130048
    %v71 = vsel %vm69, %v29, 0
    %73 = vmatprep.subr.mxu0 0.0
    %74 = vmatpush1.msra.mxu0 %v30
    %75 = vmatprep.subr.mxu0 0.0
    %76 = vmatpush1.msra.mxu0 %v31
    %77 = vmatprep.subr.mxu0 0.0
    %78 = vmatpush1.msra.mxu0 0.0
    %79 = vmatprep.subr.mxu0 0.0
    %80 = vmatpush1.msra.mxu0 0.0
    %81 = vmatprep.subr.mxu0 0.0
    %82 = vmatpush1.msra.mxu0 0.0
    %83 = vmatprep.subr.mxu0 0.0
    %84 = vmatpush1.msra.mxu0 0.0
    %85 = vmatprep.subr.mxu0 0.0
    %86 = vmatpush1.msra.mxu0 0.0
    %87 = vmatprep.subr.mxu0 0.0
    %88 = vmatpush1.msra.mxu0 0.0
    %89 = vmatprep.subr.mxu0 0.0
    %90 = vmatpush1.msra.mxu0 0.0
    %91 = vmatprep.subr.mxu0 0.0
    %92 = vmatpush1.msra.mxu0 0.0
    %93 = vmatprep.subr.mxu0 0.0
    %94 = vmatpush1.msra.mxu0 0.0
    %95 = vmatprep.subr.mxu0 0.0
    %96 = vmatpush1.msra.mxu0 0.0
    %97 = vmatprep.subr.mxu0 0.0
    %98 = vmatpush1.msra.mxu0 0.0
    %99 = vmatprep.subr.mxu0 0.0
    %100 = vmatpush1.msra.mxu0 0.0
    %101 = vmatprep.subr.mxu0 0.0
    %102 = vmatpush1.msra.mxu0 0.0
    %103 = vmatprep.subr.mxu0 0.0
    %104 = vmatpush1.msra.mxu0 0.0
    %105 = vmatprep.subr.mxu0 0.0
    %106 = vmatpush1.msra.mxu0 0.0
    %107 = vmatprep.subr.mxu0 0.0
    %108 = vmatpush1.msra.mxu0 0.0
    %109 = vmatprep.subr.mxu0 0.0
    %110 = vmatpush1.msra.mxu0 0.0
    %111 = vmatprep.subr.mxu0 0.0
    %112 = vmatpush1.msra.mxu0 0.0
    %113 = vmatprep.subr.mxu0 0.0
    %114 = vmatpush1.msra.mxu0 0.0
    %115 = vmatprep.subr.mxu0 0.0
    %116 = vmatpush1.msra.mxu0 0.0
    %117 = vmatprep.subr.mxu0 0.0
    %118 = vmatpush1.msra.mxu0 0.0
    %119 = vmatprep.subr.mxu0 0.0
    %120 = vmatpush1.msra.mxu0 0.0
    %121 = vmatprep.subr.mxu0 0.0
    %122 = vmatpush1.msra.mxu0 0.0
    %123 = vmatprep.subr.mxu0 0.0
    %124 = vmatpush1.msra.mxu0 0.0
    %125 = vmatprep.subr.mxu0 0.0
    %126 = vmatpush1.msra.mxu0 0.0
    %127 = vmatprep.subr.mxu0 0.0
    %128 = vmatpush1.msra.mxu0 0.0
    %129 = vmatprep.subr.mxu0 0.0
    %130 = vmatpush1.msra.mxu0 0.0
    %131 = vmatprep.subr.mxu0 0.0
    %132 = vmatpush1.msra.mxu0 0.0
    %133 = vmatprep.subr.mxu0 0.0
    %134 = vmatpush1.msra.mxu0 0.0
    %135 = vmatprep.subr.mxu0 0.0
    %136 = vmatpush1.msra.mxu0 0.0
    %137 = vmatprep.mubr.f32.mxu0 0.0
    %138 = vmatmul.mubr.f32.gmra.mrb[0].mxu0 %v71
    %v139 = vpop.f32.mrb[0].mxu0
    %v140 = vadd.f32 %v68, %v139
    %v141 = vpop.f32.mrb[0].mxu0
    %142 = vdwg.mxu0
    %v143 = vtanh.pop %v140
    %v144 = vlaneseq
    %v145 = vshrl.u32 %v144, 7
    %v146 = vsub.s32 1, %v145
    %v147 = vrot.slane %v64, %v146
    %148 = vmatprep.subr.mxu0 0.0
    %149 = vmatpush1.msra.mxu0 %v32
    %150 = vmatprep.subr.mxu0 0.0
    %151 = vmatpush1.msra.mxu0 %v33
    %152 = vmatprep.subr.mxu0 0.0
    %153 = vmatpush1.msra.mxu0 %v34
    %154 = vmatprep.subr.mxu0 0.0
    %155 = vmatpush1.msra.mxu0 %v35
    %156 = vmatprep.subr.mxu0 0.0
    %157 = vmatpush1.msra.mxu0 %v36
    %158 = vmatprep.subr.mxu0 0.0
    %159 = vmatpush1.msra.mxu0 %v37
    %160 = vmatprep.subr.mxu0 0.0
    %161 = vmatpush1.msra.mxu0 %v38
    %162 = vmatprep.subr.mxu0 0.0
    %163 = vmatpush1.msra.mxu0 %v39
    %164 = vmatprep.subr.mxu0 0.0
    %165 = vmatpush1.msra.mxu0 %v40
    %166 = vmatprep.subr.mxu0 0.0
    %167 = vmatpush1.msra.mxu0 %v41
    %168 = vmatprep.subr.mxu0 0.0
    %169 = vmatpush1.msra.mxu0 %v42
    %170 = vmatprep.subr.mxu0 0.0
    %171 = vmatpush1.msra.mxu0 %v43
    %172 = vmatprep.subr.mxu0 0.0
    %173 = vmatpush1.msra.mxu0 %v44
    %174 = vmatprep.subr.mxu0 0.0
    %175 = vmatpush1.msra.mxu0 %v45
    %176 = vmatprep.subr.mxu0 0.0
    %177 = vmatpush1.msra.mxu0 %v46
    %178 = vmatprep.subr.mxu0 0.0
    %179 = vmatpush1.msra.mxu0 %v47
    %180 = vmatprep.subr.mxu0 0.0
    %181 = vmatpush1.msra.mxu0 0.0
    %182 = vmatprep.subr.mxu0 0.0
    %183 = vmatpush1.msra.mxu0 0.0
    %184 = vmatprep.subr.mxu0 0.0
    %185 = vmatpush1.msra.mxu0 0.0
    %186 = vmatprep.subr.mxu0 0.0
    %187 = vmatpush1.msra.mxu0 0.0
    %188 = vmatprep.subr.mxu0 0.0
    %189 = vmatpush1.msra.mxu0 0.0
    %190 = vmatprep.subr.mxu0 0.0
    %191 = vmatpush1.msra.mxu0 0.0
    %192 = vmatprep.subr.mxu0 0.0
    %193 = vmatpush1.msra.mxu0 0.0
    %194 = vmatprep.subr.mxu0 0.0
    %195 = vmatpush1.msra.mxu0 0.0
    %196 = vmatprep.subr.mxu0 0.0
    %197 = vmatpush1.msra.mxu0 0.0
    %198 = vmatprep.subr.mxu0 0.0
    %199 = vmatpush1.msra.mxu0 0.0
    %200 = vmatprep.subr.mxu0 0.0
    %201 = vmatpush1.msra.mxu0 0.0
    %202 = vmatprep.subr.mxu0 0.0
    %203 = vmatpush1.msra.mxu0 0.0
    %204 = vmatprep.subr.mxu0 0.0
    %205 = vmatpush1.msra.mxu0 0.0
    %206 = vmatprep.subr.mxu0 0.0
    %207 = vmatpush1.msra.mxu0 0.0
    %208 = vmatprep.subr.mxu0 0.0
    %209 = vmatpush1.msra.mxu0 0.0
    %210 = vmatprep.subr.mxu0 0.0
    %211 = vmatpush1.msra.mxu0 0.0
    %212 = vmatprep.mubr.f32.mxu0 0.0
    %213 = vmatmul.mubr.f32.gmra.mrb[0].mxu0 %v143
    %v214 = vpop.f32.mrb[0].mxu0
    %v215 = vadd.f32 %v147, %v214
    %v216 = vpop.f32.mrb[0].mxu0
    %217 = vdwg.mxu0
    %v218 = vtanh.pop %v215
    %v219 = vlaneseq
    %v220 = vshrl.u32 %v219, 7
    %v221 = vsub.s32 2, %v220
    %v222 = vrot.slane %v64, %v221
    %223 = vmatprep.subr.mxu0 0.0
    %224 = vmatpush1.msra.mxu0 %v48
    %225 = vmatprep.subr.mxu0 0.0
    %226 = vmatpush1.msra.mxu0 %v49
    %227 = vmatprep.subr.mxu0 0.0
    %228 = vmatpush1.msra.mxu0 %v50
    %229 = vmatprep.subr.mxu0 0.0
    %230 = vmatpush1.msra.mxu0 %v51
    %231 = vmatprep.subr.mxu0 0.0
    %232 = vmatpush1.msra.mxu0 %v52
    %233 = vmatprep.subr.mxu0 0.0
    %234 = vmatpush1.msra.mxu0 %v53
    %235 = vmatprep.subr.mxu0 0.0
    %236 = vmatpush1.msra.mxu0 %v54
    %237 = vmatprep.subr.mxu0 0.0
    %238 = vmatpush1.msra.mxu0 %v55
    %239 = vmatprep.subr.mxu0 0.0
    %240 = vmatpush1.msra.mxu0 %v56
    %241 = vmatprep.subr.mxu0 0.0
    %242 = vmatpush1.msra.mxu0 %v57
    %243 = vmatprep.subr.mxu0 0.0
    %244 = vmatpush1.msra.mxu0 %v58
    %245 = vmatprep.subr.mxu0 0.0
    %246 = vmatpush1.msra.mxu0 %v59
    %247 = vmatprep.subr.mxu0 0.0
    %248 = vmatpush1.msra.mxu0 %v60
    %249 = vmatprep.subr.mxu0 0.0
    %250 = vmatpush1.msra.mxu0 %v61
    %251 = vmatprep.subr.mxu0 0.0
    %252 = vmatpush1.msra.mxu0 %v62
    %253 = vmatprep.subr.mxu0 0.0
    %254 = vmatpush1.msra.mxu0 %v63
    %255 = vmatprep.subr.mxu0 0.0
    %256 = vmatpush1.msra.mxu0 0.0
    %257 = vmatprep.subr.mxu0 0.0
    %258 = vmatpush1.msra.mxu0 0.0
    %259 = vmatprep.subr.mxu0 0.0
    %260 = vmatpush1.msra.mxu0 0.0
    %261 = vmatprep.subr.mxu0 0.0
    %262 = vmatpush1.msra.mxu0 0.0
    %263 = vmatprep.subr.mxu0 0.0
    %264 = vmatpush1.msra.mxu0 0.0
    %265 = vmatprep.subr.mxu0 0.0
    %266 = vmatpush1.msra.mxu0 0.0
    %267 = vmatprep.subr.mxu0 0.0
    %268 = vmatpush1.msra.mxu0 0.0
    %269 = vmatprep.subr.mxu0 0.0
    %270 = vmatpush1.msra.mxu0 0.0
    %271 = vmatprep.subr.mxu0 0.0
    %272 = vmatpush1.msra.mxu0 0.0
    %273 = vmatprep.subr.mxu0 0.0
    %274 = vmatpush1.msra.mxu0 0.0
    %275 = vmatprep.subr.mxu0 0.0
    %276 = vmatpush1.msra.mxu0 0.0
    %277 = vmatprep.subr.mxu0 0.0
    %278 = vmatpush1.msra.mxu0 0.0
    %279 = vmatprep.subr.mxu0 0.0
    %280 = vmatpush1.msra.mxu0 0.0
    %281 = vmatprep.subr.mxu0 0.0
    %282 = vmatpush1.msra.mxu0 0.0
    %283 = vmatprep.subr.mxu0 0.0
    %284 = vmatpush1.msra.mxu0 0.0
    %285 = vmatprep.subr.mxu0 0.0
    %286 = vmatpush1.msra.mxu0 0.0
    %287 = vmatprep.mubr.f32.mxu0 0.0
    %288 = vmatmul.mubr.f32.gmra.mrb[0].mxu0 %v218
    %v289 = vpop.f32.mrb[0].mxu0
    %v290 = vadd.f32 %v222, %v289
    %v291 = vpop.f32.mrb[0].mxu0
    %292 = vdwg.mxu0
    %v293 = vlaneseq
    %v294 = vand.u32 %v293, 127
    %vm295 = vcmp.lt.s32.totalorder %v294, 8
    %v296 = vsel %vm295, %v290, -1e+30
    %297 = vmax.xlane.f32.xlu0 %v296
    %v298 = vpop.xlane.xlu0 %297
    %v299 = vsub.f32 %v296, %v298
    %v300 = vmul.f32 %v299, 1.442695
    %v301 = vpow.pop %v300
    %302 = vadd.xlane.f32.xlu0 %v301
    %v303 = vpop.xlane.xlu0 %302
    %v304 = vlog2.pop %v303
    %v305 = vmul.f32 %v304, 0.6931472
    %v306 = vsub.f32 %v299, %v305
    %v307 = vmul.f32 %v306, 1.442695
    %v308 = vpow.pop %v307
    %v309 = vld [vmem:[%s1] sm:$0xff]
    %310 = vset.pattern.permute.xlu0 0
    %311 = vperm.xlu0 %310, %v309
    %v312 = vpop.permute.xlu0 %311
    %vm313 = vcmp.eq.s32.totalorder %v294, %v312
    %v314 = vsel %vm313, %v306, 0.0
    %315 = vadd.xlane.f32.xlu0 %v314
    %v316 = vpop.xlane.xlu0 %315
    %v317 = vsel %vm295, %v306, 0.0
    %v318 = vmul.f32 %v308, %v317
    %319 = vadd.xlane.f32.xlu0 %v318
    %v320 = vpop.xlane.xlu0 %319
    %v321 = vsub.f32 0.0, %v320
    %vm322 = vcmp.eq.s32.totalorder %v294, 8
    %v323 = vsel %vm322, %v316, 0.0
    %v324 = vadd.f32 %v308, %v323
    %vm325 = vcmp.eq.s32.totalorder %v294, 9
    %v326 = vsel %vm325, %v290, 0.0
    %v327 = vadd.f32 %v324, %v326
    %vm328 = vcmp.eq.s32.totalorder %v294, 10
    %v329 = vsel %vm328, %v321, 0.0
    %v330 = vadd.f32 %v327, %v329
    %331 = vst [vmem:[#allocation5] sm:$0xff] %v330
    // Predicated region
    $region18: #{tpu_custom_call.1} parent=1 // pred_check
      _
    $region19: #{tpu_custom_call.1} parent=1 // pred_check_branch
      %333 = sbr.rel (0) target = $region21
    $region20: #{tpu_custom_call.1} parent=1 // pred_region
      %s335 = ssub.s32 128, 128
      %336 = vsyncadd [#allocation4], %s335
      %s338 = sshll.u32 [#allocation5], 4
      %s339 = int_to_ptr.vmem [resolvable:$true] %s338
      %341 = dma.vmem_to_hbm [thread:$0]  %s339, 128, %s3, [#allocation4]
    $region21: #{tpu_custom_call.1} parent=1 // pred_fallthru
      _
    // Predicated region
    $region22: #{tpu_custom_call.1} parent=1 // pred_check
      _
    $region23: #{tpu_custom_call.1} parent=1 // pred_check_branch
      %343 = sbr.rel (0) target = $region25
    $region24: #{tpu_custom_call.1} parent=1 // pred_region
      %344 = dma.done [#allocation4], 128
    $region25: #{tpu_custom_call.1} parent=1 // pred_fallthru
      _
    %345 = vsyncpa [#allocation3], 1
    %346 = vsyncpa [#allocation4], 1

</llo_original>
